<compile_context>
chip_gen: v5e
topology: v5e:2x2
jax: 0.10.0
libtpu: 0.0.40
codegen_flags: <defaults>
</compile_context>

<pallas_src>
import jax
import jax.numpy as jnp
from jax import lax
from jax.experimental import pallas as pl
from jax.experimental.pallas import tpu as pltpu

_LANE = 128
_SUB = 8


def _feature_loss_kernel(n_ref, h_ref, pts_ref, out_ref):
    """n_ref   : (1,)  int32 SMEM -- number of valid matches
       h_ref   : (8,)  f32   SMEM -- homography params h0..h7 (h8 == 1)
       pts_ref : (4, TR, 128) VMEM tile -- streams ax, ay, bx, by (sublane-dense)
       out_ref : (1, 8, 128)  VMEM -- this tile's partial sum of squared errors."""
    t = pl.program_id(0)
    tr = pts_ref.shape[1]
    tile_pts = tr * _LANE

    x = pts_ref[0].astype(jnp.float32)            # (TR, 128)
    y = pts_ref[1].astype(jnp.float32)
    bx = pts_ref[2].astype(jnp.float32)
    by = pts_ref[3].astype(jnp.float32)

    h0 = h_ref[0]; h1 = h_ref[1]; h2 = h_ref[2]
    h3 = h_ref[3]; h4 = h_ref[4]; h5 = h_ref[5]
    h6 = h_ref[6]; h7 = h_ref[7]

    # one shared (exact) reciprocal of the projective denominator
    inv_w = 1.0 / (h6 * x + h7 * y + 1.0)
    px = (h0 * x + h1 * y + h2) * inv_w
    py = (h3 * x + h4 * y + h5) * inv_w

    dx = bx - px
    dy = by - py
    err = dx * dx + dy * dy                       # (TR, 128)

    def _reduce_and_store(e):
        # fold sublane-groups with pure VPU adds -> one (8,128) vreg per tile
        out_ref[0] = jnp.sum(e.reshape(tr // _SUB, _SUB, _LANE), axis=0)

    full = (t + 1) * tile_pts <= n_ref[0]         # tile contains no padded points

    @pl.when(full)
    def _():                                      # unmasked fast path
        _reduce_and_store(err)

    @pl.when(jnp.logical_not(full))
    def _():                                      # only the last (padded) tile
        lin = (lax.broadcasted_iota(jnp.int32, (tr, _LANE), 0) * _LANE
               + lax.broadcasted_iota(jnp.int32, (tr, _LANE), 1))
        thresh = n_ref[0] - t * tile_pts
        _reduce_and_store(jnp.where(lin < thresh, err, 0.0))


def _homography_vec8(Ft):
    """Normalize Ft to the 8-parameter vector [h0..h7] (h8 := 1)."""
    Ft = jnp.asarray(Ft, dtype=jnp.float32)
    if Ft.shape == (3, 3):
        Ft = Ft / Ft[2, 2]
        return jnp.concatenate([Ft[0, :], Ft[1, :], Ft[2, :2]])
    flat = Ft.reshape(-1)
    if flat.shape[0] == 9:
        flat = flat / flat[8]
        return flat[:8]
    assert flat.shape[0] == 8, "Ft must be a (3,3), (9,) or (8,) homography"
    return flat


def feature_loss(Ft, pA, pB, *, max_points_per_tile=32768):
    """Pallas-backed Feature_LossFunc forward.

    Ft : (3,3) / (9,) / (8,) homography warp parameters.
    pA : (N, 2) matched keypoints in the unstable frame Itx.
    pB : (N, 2) matched keypoints in the ground-truth stable frame Ity.
    Returns scalar f32:  MSE(pB, H(pA)) / (255*255), or 1e-8/(255*255) if N == 0.
    """
    # TODO(synk): SURF_RAN_Match (OpenCV SURF keypoints + RANSAC matching) has no
    # Pallas/TPU equivalent; the matched pairs (pA, pB) must be produced on host.
    N = int(pA.shape[0])
    if N == 0:
        return jnp.float32(1e-8) / jnp.float32(255.0 * 255.0)

    h8 = _homography_vec8(Ft)
    n_arr = jnp.array([N], dtype=jnp.int32)

    # fully sublane/lane-dense layout: 4 streams of shape (rows, 128)
    rows = (N + _LANE - 1) // _LANE
    rows = ((rows + _SUB - 1) // _SUB) * _SUB
    max_rows = max(_SUB, (max_points_per_tile // _LANE) // _SUB * _SUB)
    tr = min(rows, max_rows)                       # sublane rows per grid step
    rows = ((rows + tr - 1) // tr) * tr            # rows % tr == 0
    npad = rows * _LANE
    grid = (rows // tr,)

    pts = jnp.concatenate([pA, pB], axis=1).T      # (4, N): ax, ay, bx, by
    pts = jnp.pad(pts, ((0, 0), (0, npad - N)))    # zero-pad, masked in-kernel
    pts = pts.reshape(4, rows, _LANE)

    partials = pl.pallas_call(
        _feature_loss_kernel,
        out_shape=jax.ShapeDtypeStruct((grid[0], _SUB, _LANE), jnp.float32),
        grid_spec=pltpu.PrefetchScalarGridSpec(
            num_scalar_prefetch=0,
            grid=grid,
            in_specs=[
                pl.BlockSpec(memory_space=pltpu.MemorySpace.SMEM),   # n
                pl.BlockSpec(memory_space=pltpu.MemorySpace.SMEM),   # h0..h7
                pl.BlockSpec((4, tr, _LANE), lambda t: (0, t, 0)),   # point tile
            ],
            out_specs=pl.BlockSpec((1, _SUB, _LANE), lambda t: (t, 0, 0)),
        ),
        compiler_params=pltpu.CompilerParams(
            dimension_semantics=("parallel",),     # per-tile partials, no carry
        ),
    )(n_arr, h8, pts)

    # tiny final reduce + mean + scaling (once, outside the kernel)
    mse = jnp.sum(partials) / jnp.float32(2 * N)   # nn.MSELoss 'mean' over (N, 2)
    return mse / jnp.float32(255.0 * 255.0)


def _reference_loss(Ft, pA, pB):
    """Plain-JAX reference with the same semantics as the PyTorch module."""
    h = _homography_vec8(Ft)
    w = h[6] * pA[:, 0] + h[7] * pA[:, 1] + 1.0
    px = (h[0] * pA[:, 0] + h[1] * pA[:, 1] + h[2]) / w
    py = (h[3] * pA[:, 0] + h[4] * pA[:, 1] + h[5]) / w
    pred = jnp.stack([px, py], axis=1)
    return jnp.mean((pB - pred) ** 2) / jnp.float32(255.0 * 255.0)


if __name__ == "__main__":
    key = jax.random.PRNGKey(0)
    k1, k2, k3, k4, k5 = jax.random.split(key, 5)

    C, H, W = 3, 16, 16
    N = 200                                        # number of SURF matches (synthetic)

    # Nominal module inputs (only consumed by the CPU-side SURF matcher).
    Itx = jax.random.randint(k1, (C, H, W), 0, 256, dtype=jnp.int32).astype(jnp.uint8)
    Ity = jax.random.randint(k2, (C, H, W), 0, 256, dtype=jnp.int32).astype(jnp.uint8)
    del Itx, Ity  # TODO(synk): these would feed SURF_RAN_Match on the host.

    # Near-identity homography warp Ft (h22 normalized to 1).
    dH = 0.01 * jax.random.normal(k3, (3, 3), dtype=jnp.float32)
    Ft = jnp.eye(3, dtype=jnp.float32) + dH.at[2, 2].set(0.0)

    # Synthetic matched point pairs: pB = H(pA) + small matching noise.
    pA = jax.random.uniform(k4, (N, 2), minval=0.0, maxval=float(W - 1),
                            dtype=jnp.float32)
    h = _homography_vec8(Ft)
    wd = h[6] * pA[:, 0] + h[7] * pA[:, 1] + 1.0
    pB = jnp.stack(
        [(h[0] * pA[:, 0] + h[1] * pA[:, 1] + h[2]) / wd,
         (h[3] * pA[:, 0] + h[4] * pA[:, 1] + h[5]) / wd], axis=1)
    pB = pB + 0.5 * jax.random.normal(k5, (N, 2), dtype=jnp.float32)

    loss = feature_loss(Ft, pA, pB)
    jax.block_until_ready(loss)

    ref = _reference_loss(Ft, pA, pB)
    assert jnp.allclose(loss, ref, rtol=1e-5, atol=1e-8), (loss, ref)

    print("KERNEL_OK")
</pallas_src>

<mosaic_0001>
module attributes {stable_mosaic.version = 11 : i64} {
  func.func @_feature_loss_kernel(%arg0: i32, %arg1: memref<1xi32, #tpu.memory_space<smem>>, %arg2: memref<8xf32, #tpu.memory_space<smem>>, %arg3: memref<4x8x128xf32, #tpu.memory_space<vmem>>, %arg4: memref<1x8x128xf32, #tpu.memory_space<vmem>>) attributes {dimension_semantics = [#tpu.dimension_semantics<parallel>], iteration_bounds = array<i64: 1>, scalar_prefetch = 0 : i64, scratch_operands = 0 : i64, tpu.core_type = #tpu.core_type<tc>, window_params = [{transform_indices = @transform_0, window_bounds = array<i64: 1>}, {transform_indices = @transform_1, window_bounds = array<i64: 8>}, {transform_indices = @transform_2, window_bounds = array<i64: 4, 8, 128>}, {transform_indices = @transform_3, window_bounds = array<i64: 1, 8, 128>}]} {
    %c0 = arith.constant 0 : index
    %c0_0 = arith.constant 0 : index
    %c0_1 = arith.constant 0 : index
    %0 = vector.load %arg3[%c0, %c0_0, %c0_1] : memref<4x8x128xf32, #tpu.memory_space<vmem>>, vector<1x8x128xf32>
    %1 = vector.shape_cast %0 : vector<1x8x128xf32> to vector<8x128xf32>
    %c1 = arith.constant 1 : index
    %c0_2 = arith.constant 0 : index
    %c0_3 = arith.constant 0 : index
    %2 = vector.load %arg3[%c1, %c0_2, %c0_3] : memref<4x8x128xf32, #tpu.memory_space<vmem>>, vector<1x8x128xf32>
    %3 = vector.shape_cast %2 : vector<1x8x128xf32> to vector<8x128xf32>
    %c2 = arith.constant 2 : index
    %c0_4 = arith.constant 0 : index
    %c0_5 = arith.constant 0 : index
    %4 = vector.load %arg3[%c2, %c0_4, %c0_5] : memref<4x8x128xf32, #tpu.memory_space<vmem>>, vector<1x8x128xf32>
    %5 = vector.shape_cast %4 : vector<1x8x128xf32> to vector<8x128xf32>
    %c3 = arith.constant 3 : index
    %c0_6 = arith.constant 0 : index
    %c0_7 = arith.constant 0 : index
    %6 = vector.load %arg3[%c3, %c0_6, %c0_7] : memref<4x8x128xf32, #tpu.memory_space<vmem>>, vector<1x8x128xf32>
    %7 = vector.shape_cast %6 : vector<1x8x128xf32> to vector<8x128xf32>
    %c0_8 = arith.constant 0 : index
    %8 = memref.load %arg2[%c0_8] : memref<8xf32, #tpu.memory_space<smem>>
    %c1_9 = arith.constant 1 : index
    %9 = memref.load %arg2[%c1_9] : memref<8xf32, #tpu.memory_space<smem>>
    %c2_10 = arith.constant 2 : index
    %10 = memref.load %arg2[%c2_10] : memref<8xf32, #tpu.memory_space<smem>>
    %c3_11 = arith.constant 3 : index
    %11 = memref.load %arg2[%c3_11] : memref<8xf32, #tpu.memory_space<smem>>
    %c4 = arith.constant 4 : index
    %12 = memref.load %arg2[%c4] : memref<8xf32, #tpu.memory_space<smem>>
    %c5 = arith.constant 5 : index
    %13 = memref.load %arg2[%c5] : memref<8xf32, #tpu.memory_space<smem>>
    %c6 = arith.constant 6 : index
    %14 = memref.load %arg2[%c6] : memref<8xf32, #tpu.memory_space<smem>>
    %c7 = arith.constant 7 : index
    %15 = memref.load %arg2[%c7] : memref<8xf32, #tpu.memory_space<smem>>
    %16 = vector.broadcast %14 : f32 to vector<8x128xf32>
    %17 = arith.mulf %16, %1 : vector<8x128xf32>
    %18 = vector.broadcast %15 : f32 to vector<8x128xf32>
    %19 = arith.mulf %18, %3 : vector<8x128xf32>
    %20 = arith.addf %17, %19 : vector<8x128xf32>
    %cst = arith.constant 1.000000e+00 : f32
    %21 = vector.broadcast %cst : f32 to vector<8x128xf32>
    %22 = arith.addf %20, %21 : vector<8x128xf32>
    %cst_12 = arith.constant 1.000000e+00 : f32
    %23 = vector.broadcast %cst_12 : f32 to vector<8x128xf32>
    %24 = arith.divf %23, %22 : vector<8x128xf32>
    %25 = vector.broadcast %8 : f32 to vector<8x128xf32>
    %26 = arith.mulf %25, %1 : vector<8x128xf32>
    %27 = vector.broadcast %9 : f32 to vector<8x128xf32>
    %28 = arith.mulf %27, %3 : vector<8x128xf32>
    %29 = arith.addf %26, %28 : vector<8x128xf32>
    %30 = vector.broadcast %10 : f32 to vector<8x128xf32>
    %31 = arith.addf %29, %30 : vector<8x128xf32>
    %32 = arith.mulf %31, %24 : vector<8x128xf32>
    %33 = vector.broadcast %11 : f32 to vector<8x128xf32>
    %34 = arith.mulf %33, %1 : vector<8x128xf32>
    %35 = vector.broadcast %12 : f32 to vector<8x128xf32>
    %36 = arith.mulf %35, %3 : vector<8x128xf32>
    %37 = arith.addf %34, %36 : vector<8x128xf32>
    %38 = vector.broadcast %13 : f32 to vector<8x128xf32>
    %39 = arith.addf %37, %38 : vector<8x128xf32>
    %40 = arith.mulf %39, %24 : vector<8x128xf32>
    %41 = arith.subf %5, %32 : vector<8x128xf32>
    %42 = arith.subf %7, %40 : vector<8x128xf32>
    %43 = arith.mulf %41, %41 : vector<8x128xf32>
    %44 = arith.mulf %42, %42 : vector<8x128xf32>
    %45 = arith.addf %43, %44 : vector<8x128xf32>
    %c1_i32 = arith.constant 1 : i32
    %46 = arith.addi %arg0, %c1_i32 : i32
    %c1024_i32 = arith.constant 1024 : i32
    %47 = arith.muli %46, %c1024_i32 : i32
    %c0_13 = arith.constant 0 : index
    %48 = memref.load %arg1[%c0_13] : memref<1xi32, #tpu.memory_space<smem>>
    %49 = arith.cmpi sle, %47, %48 : i32
    %50 = arith.extui %49 : i1 to i32
    %c0_i32 = arith.constant 0 : i32
    %51 = arith.cmpi ne, %50, %c0_i32 : i32
    scf.if %51 {
      %55 = vector.shape_cast %45 : vector<8x128xf32> to vector<1x8x128xf32>
      %cst_15 = arith.constant dense<0.000000e+00> : vector<8x128xf32>
      %56 = vector.multi_reduction <add>, %55, %cst_15 [0] : vector<1x8x128xf32> to vector<8x128xf32>
      %c0_16 = arith.constant 0 : index
      %c0_17 = arith.constant 0 : index
      %c0_18 = arith.constant 0 : index
      %57 = vector.load %arg4[%c0_16, %c0_17, %c0_18] : memref<1x8x128xf32, #tpu.memory_space<vmem>>, vector<1x8x128xf32>
      %58 = vector.shape_cast %57 : vector<1x8x128xf32> to vector<8x128xf32>
      %59 = vector.shape_cast %56 : vector<8x128xf32> to vector<1x8x128xf32>
      tpu.vector_store %arg4[%c0_16, %c0_17, %c0_18], %59 {strides = array<i32>} : memref<1x8x128xf32, #tpu.memory_space<vmem>>, vector<1x8x128xf32>,
    } else {
    }
    %true = arith.constant true
    %52 = arith.xori %49, %true : i1
    %53 = arith.extui %52 : i1 to i32
    %c0_i32_14 = arith.constant 0 : i32
    %54 = arith.cmpi ne, %53, %c0_i32_14 : i32
    scf.if %54 {
      %55 = tpu.iota {dimensions = array<i32: 0>} : vector<8x128xi32>
      %c128_i32 = arith.constant 128 : i32
      %56 = vector.broadcast %c128_i32 : i32 to vector<8x128xi32>
      %57 = arith.muli %55, %56 : vector<8x128xi32>
      %58 = tpu.iota {dimensions = array<i32: 1>} : vector<8x128xi32>
      %59 = arith.addi %57, %58 : vector<8x128xi32>
      %c0_15 = arith.constant 0 : index
      %60 = memref.load %arg1[%c0_15] : memref<1xi32, #tpu.memory_space<smem>>
      %c1024_i32_16 = arith.constant 1024 : i32
      %61 = arith.muli %arg0, %c1024_i32_16 : i32
      %62 = arith.subi %60, %61 : i32
      %63 = vector.broadcast %62 : i32 to vector<8x128xi32>
      %64 = arith.cmpi slt, %59, %63 : vector<8x128xi32>
      %cst_17 = arith.constant 0.000000e+00 : f32
      %65 = vector.broadcast %cst_17 : f32 to vector<8x128xf32>
      %66 = arith.select %64, %45, %65 : vector<8x128xi1>, vector<8x128xf32>
      %67 = vector.shape_cast %66 : vector<8x128xf32> to vector<1x8x128xf32>
      %cst_18 = arith.constant dense<0.000000e+00> : vector<8x128xf32>
      %68 = vector.multi_reduction <add>, %67, %cst_18 [0] : vector<1x8x128xf32> to vector<8x128xf32>
      %c0_19 = arith.constant 0 : index
      %c0_20 = arith.constant 0 : index
      %c0_21 = arith.constant 0 : index
      %69 = vector.load %arg4[%c0_19, %c0_20, %c0_21] : memref<1x8x128xf32, #tpu.memory_space<vmem>>, vector<1x8x128xf32>
      %70 = vector.shape_cast %69 : vector<1x8x128xf32> to vector<8x128xf32>
      %71 = vector.shape_cast %68 : vector<8x128xf32> to vector<1x8x128xf32>
      tpu.vector_store %arg4[%c0_19, %c0_20, %c0_21], %71 {strides = array<i32>} : memref<1x8x128xf32, #tpu.memory_space<vmem>>, vector<1x8x128xf32>,
    } else {
    }
    return
  }
  func.func @transform_0(%arg0: i32) -> i32 {
    %c0_i32 = arith.constant 0 : i32
    %c0_i32_0 = arith.constant 0 : i32
    return %c0_i32 : i32
  }
  func.func @transform_1(%arg0: i32) -> i32 {
    %c0_i32 = arith.constant 0 : i32
    %c0_i32_0 = arith.constant 0 : i32
    return %c0_i32 : i32
  }
  func.func @transform_2(%arg0: i32) -> (i32, i32, i32) {
    %c0_i32 = arith.constant 0 : i32
    %c0_i32_0 = arith.constant 0 : i32
    %c0_i32_1 = arith.constant 0 : i32
    return %c0_i32, %arg0, %c0_i32_0 : i32, i32, i32
  }
  func.func @transform_3(%arg0: i32) -> (i32, i32, i32) {
    %c0_i32 = arith.constant 0 : i32
    %c0_i32_0 = arith.constant 0 : i32
    %c0_i32_1 = arith.constant 0 : i32
    return %arg0, %c0_i32, %c0_i32_0 : i32, i32, i32
  }
}

</mosaic_0001>

<llo_original>
// kernel: tpu_custom_call.1
$region0: #{tpu_custom_call.1}
  #allocation0 [shape = 'u32[]', space=smem, size = 0x4, offset = 0x4, fixed_abs, tag = 'smem constant byte address 0x4 - core index']
  #allocation1 [shape = 'u32[72,128]{1,0:T(1,128)}', space=vmem, size = 0x9000, scoped, tag = 'internal scratch']
  #allocation2 [shape = 's32[1]{0:T(128)S(6)}', space=smem, size = 0x200, scoped, tag = 'scoped memory for tpu_custom_call.1']
  %s0 = inlined_call_operand.<no memory space> [shape: s32[1], index: 0, kind: input, shape index: {}]
  %s1 = inlined_call_operand.vmem [shape: f32[8], index: 1, kind: input, shape index: {}]
  %s2 = inlined_call_operand.hbm [shape: f32[4,8,128], index: 2, kind: input, shape index: {}]
  %s3 = inlined_call_operand.hbm [shape: f32[1,8,128], index: 3, kind: output, shape index: {}]
  %s4 = sld [smem:[#allocation0]]
  $region38: #{tpu_custom_call.1} parent=0
    _
  %s6 = ssub.s32 1, %s4
  %s7 = scalar_select 0, %s6, %s4
  %8 = sst [smem:[#allocation2]] %s0
  $region1: #{tpu_custom_call.1} parent=0
    #allocation3 [shape = 'u8[512]{0}', space=smem, size = 0x200, scoped, tag = 'input window, operand 1, single buffered']
    #allocation4 [shape = 's32[1]{0}', space=sflag, size = 0x4, scoped, tag = 'scoped memory for tpu_custom_call.1']
    #allocation5 [shape = 's32[1]{0}', space=sflag, size = 0x4, scoped, tag = 'scoped memory for tpu_custom_call.1']
    #allocation6 [shape = 's32[1]{0}', space=sflag, size = 0x4, scoped, tag = 'scoped memory for tpu_custom_call.1']
    #allocation7 [shape = 'u8[16384]{0}', space=vmem, size = 0x4000, scoped, tag = 'input window, operand 2, single buffered']
    #allocation8 [shape = 'u8[4096]{0}', space=vmem, size = 0x1000, scoped, tag = 'output window, operand 0, single buffered']
    %9 = vsyncpa [#allocation6], 0
    %10 = vsyncpa [#allocation4], 0
    %11 = vsyncpa [#allocation5], 0
    // Predicated region
    $region2: #{tpu_custom_call.1} parent=1 // pred_check
      _
    $region3: #{tpu_custom_call.1} parent=1 // pred_check_branch
      %13 = sbr.rel (0) target = $region5
    $region4: #{tpu_custom_call.1} parent=1 // pred_region
      _
    $region5: #{tpu_custom_call.1} parent=1 // pred_fallthru
      _
    // Predicated region
    $region6: #{tpu_custom_call.1} parent=1 // pred_check
      _
    $region7: #{tpu_custom_call.1} parent=1 // pred_check_branch
      %15 = sbr.rel (0) target = $region9
    $region8: #{tpu_custom_call.1} parent=1 // pred_region
      %17 = vsyncadd [#allocation6], 0
      %s19 = sshll.u32 %s1, 4
      %s20 = int_to_ptr.vmem [resolvable:$true] %s19
      %22 = dma.vmem_to_smem %s20, 16, [#allocation3], [#allocation6]
    $region9: #{tpu_custom_call.1} parent=1 // pred_fallthru
      _
    // Predicated region
    $region10: #{tpu_custom_call.1} parent=1 // pred_check
      _
    $region11: #{tpu_custom_call.1} parent=1 // pred_check_branch
      %24 = sbr.rel (0) target = $region13
    $region12: #{tpu_custom_call.1} parent=1 // pred_region
      %26 = vsyncadd [#allocation4], 0
      %s27 = sshll.u32 %s2, 4
      %s28 = int_to_ptr.hbm [resolvable:$true] %s27
      %s29 = sshll.u32 [#allocation7], 4
      %s30 = int_to_ptr.vmem [resolvable:$true] %s29
      %35 = dma.hbm_to_vmem [thread:$0]  %s28, 512, %s30, [#allocation4], 128, 128, 8
    $region13: #{tpu_custom_call.1} parent=1 // pred_fallthru
      _
    // Predicated region
    $region14: #{tpu_custom_call.1} parent=1 // pred_check
      _
    $region15: #{tpu_custom_call.1} parent=1 // pred_check_branch
      %37 = sbr.rel (0) target = $region17
    $region16: #{tpu_custom_call.1} parent=1 // pred_region
      %39 = dma.done [#allocation6], 16
    $region17: #{tpu_custom_call.1} parent=1 // pred_fallthru
      _
    // Predicated region
    $region18: #{tpu_custom_call.1} parent=1 // pred_check
      _
    $region19: #{tpu_custom_call.1} parent=1 // pred_check_branch
      %41 = sbr.rel (0) target = $region21
    $region20: #{tpu_custom_call.1} parent=1 // pred_region
      %43 = dma.done [#allocation4], 512
    $region21: #{tpu_custom_call.1} parent=1 // pred_fallthru
      _
    %44 = sfence
    %v45 = vld [vmem:[#allocation7] sm:$0xff]
    %s46 = scalar_lea.vmem [#allocation7], 8
    %v47 = vld [vmem:[%s46] sm:$0xff]
    %s48 = scalar_lea.vmem [#allocation7], 16
    %v49 = vld [vmem:[%s48] sm:$0xff]
    %s50 = scalar_lea.vmem [#allocation7], 24
    %v51 = vld [vmem:[%s50] sm:$0xff]
    %s52 = sld [smem:[#allocation3]]
    %s53 = sld [smem:[#allocation3 + $0x1]]
    %s54 = sld [smem:[#allocation3 + $0x2]]
    %s55 = sld [smem:[#allocation3 + $0x3]]
    %s56 = sld [smem:[#allocation3 + $0x4]]
    %s57 = sld [smem:[#allocation3 + $0x5]]
    %s58 = sld [smem:[#allocation3 + $0x6]]
    %s59 = sld [smem:[#allocation3 + $0x7]]
    %v60 = vstv %s58
    %v61 = vmul.f32 %v60, %v45
    %v62 = vstv %s59
    %v63 = vmul.f32 %v62, %v47
    %v64 = vadd.f32 %v61, %v63
    %v65 = vadd.f32 %v64, 1.0
    %v66 = vrcp.pop %v65
    %v67 = vmul.f32 %v65, %v66
    %v68 = vsub.f32 1.0, %v67
    %v69 = vmul.f32 %v66, %v68
    %v70 = vadd.f32 %v66, %v69
    %vm71 = vweird.f32 %v65
    %vm72 = vweird.f32 %v66
    %vm73 = vmor %vm71, %vm72
    %v74 = vsel %vm73, %v66, %v70
    %v75 = vand.u32 2147483647, %v65
    %vm76 = vcmp.eq.f32.partialorder %v75, 8.507059e+37
    %v77 = vand.u32 %v65, 2147483648
    %v78 = vor.u32 1.1754944e-38, %v77
    %v79 = vsel %vm76, %v78, %v74
    %v80 = vmul.f32 1.0, %v79
    %v81 = vstv %s52
    %v82 = vmul.f32 %v81, %v45
    %v83 = vstv %s53
    %v84 = vmul.f32 %v83, %v47
    %v85 = vadd.f32 %v82, %v84
    %v86 = vstv %s54
    %v87 = vadd.f32 %v85, %v86
    %v88 = vmul.f32 %v87, %v80
    %v89 = vstv %s55
    %v90 = vmul.f32 %v89, %v45
    %v91 = vstv %s56
    %v92 = vmul.f32 %v91, %v47
    %v93 = vadd.f32 %v90, %v92
    %v94 = vstv %s57
    %v95 = vadd.f32 %v93, %v94
    %v96 = vmul.f32 %v95, %v80
    %v97 = vsub.f32 %v49, %v88
    %v98 = vsub.f32 %v51, %v96
    %v99 = vmul.f32 %v97, %v97
    %v100 = vmul.f32 %v98, %v98
    %v101 = vadd.f32 %v99, %v100
    %s102 = sadd.s32 0, 1
    %s103 = smul.u32 %s102, 1024
    %s104 = sld [smem:[#allocation2]]
    %p105 = scmp.le.s32.totalorder %s103, %s104
    // Predicated region
    $region22: #{tpu_custom_call.1} parent=1 // pred_check
      %p106 = pneg %p105
    $region23: #{tpu_custom_call.1} parent=1 // pred_check_branch
      %108 = sbr.rel (%p106) target = $region25
    $region24: #{tpu_custom_call.1} parent=1 // pred_region
      %v109 = vadd.f32 %v101, 0.0
      %110 = vst [vmem:[#allocation8] sm:$0xff] %v109
    $region25: #{tpu_custom_call.1} parent=1 // pred_fallthru
      _
    %p111 = scmp.gt.s32.totalorder %s103, %s104
    // Predicated region
    $region26: #{tpu_custom_call.1} parent=1 // pred_check
      %p112 = pneg %p111
    $region27: #{tpu_custom_call.1} parent=1 // pred_check_branch
      %114 = sbr.rel (%p112) target = $region29
    $region28: #{tpu_custom_call.1} parent=1 // pred_region
      %v115 = vlaneseq
      %v116 = vshrl.u32 %v115, 7
      %v117 = vmul.u32 %v116, 128
      %v118 = vlaneseq
      %v119 = vand.u32 %v118, 127
      %v120 = vadd.s32 %v117, %v119
      %s121 = sld [smem:[#allocation2]]
      %s122 = smul.u32 0, 1024
      %s123 = ssub.s32 %s121, %s122
      %v124 = vstv %s123
      %vm125 = vcmp.lt.s32.totalorder %v120, %v124
      %v126 = vsel %vm125, %v101, 0.0
      %v127 = vadd.f32 %v126, 0.0
      %128 = vst [vmem:[#allocation8] sm:$0xff] %v127
    $region29: #{tpu_custom_call.1} parent=1 // pred_fallthru
      _
    // Predicated region
    $region30: #{tpu_custom_call.1} parent=1 // pred_check
      _
    $region31: #{tpu_custom_call.1} parent=1 // pred_check_branch
      %130 = sbr.rel (0) target = $region33
    $region32: #{tpu_custom_call.1} parent=1 // pred_region
      %132 = vsyncadd [#allocation5], 0
      %s134 = sshll.u32 [#allocation8], 4
      %s135 = int_to_ptr.vmem [resolvable:$true] %s134
      %s136 = sshll.u32 %s3, 4
      %s137 = int_to_ptr.hbm [resolvable:$true] %s136
      %139 = dma.vmem_to_hbm [thread:$0]  %s135, 128, %s137, [#allocation5]
    $region33: #{tpu_custom_call.1} parent=1 // pred_fallthru
      _
    // Predicated region
    $region34: #{tpu_custom_call.1} parent=1 // pred_check
      _
    $region35: #{tpu_custom_call.1} parent=1 // pred_check_branch
      %141 = sbr.rel (0) target = $region37
    $region36: #{tpu_custom_call.1} parent=1 // pred_region
      %143 = dma.done [#allocation5], 128
    $region37: #{tpu_custom_call.1} parent=1 // pred_fallthru
      _
    %144 = vsyncpa [#allocation4], 1
    %145 = vsyncpa [#allocation5], 1
    %146 = vsyncpa [#allocation6], 1

</llo_original>
